<compile_context>
chip_gen: v6e
topology: v6e:2x2x1
jax: 0.10.0
libtpu: 0.0.40
codegen_flags: <defaults>
</compile_context>

<pallas_src>
import functools

import numpy as np
import jax
import jax.numpy as jnp
from jax.experimental import pallas as pl
from jax.experimental.pallas import tpu as pltpu

CLAMP_MAX = 0.05   # `max` in the original script
CLAMP_MIN = -0.1   # `min` in the original script


def _model_kernel(pat_ref, w1_ref, b1_ref, w2_ref, b2_ref, avg_ref, msel_ref,
                  out_ref):
    """Full forward pass: 3 GEMMs + 4 one-hot gather GEMMs + clamp chains."""
    # ---- stage 1: grouped 5x5 conv == block-diagonal GEMM over im2col patches
    #      [Cout1, K*K*Cin] @ [K*K*Cin, S1] -> [Cout1, S1]
    v1 = jnp.dot(w1_ref[...], pat_ref[...],
                 preferred_element_type=jnp.float32) + b1_ref[...]
    # v2 = clamp_max(v1, 0.05); v3 = clamp_max(v2, 0.05)
    v3 = jnp.minimum(v1, CLAMP_MAX)

    # ---- stage 2: grouped 1x1 conv == block-diagonal [Cout2, Cout1] GEMM
    v4 = jnp.dot(w2_ref[...], v3,
                 preferred_element_type=jnp.float32) + b2_ref[...]
    # v5 = clamp_min(v4, 0.05); v6 = clamp_min(v5, -0.1)  (second is a no-op)
    v6 = jnp.maximum(v4, CLAMP_MAX)

    # ---- stage 3: AvgPool2d(3, stride=2) == one gather-sum matmul
    #      [Cout2, S1] @ [S1, S2] -> [Cout2, S2]
    v7 = jnp.dot(v6, avg_ref[...], preferred_element_type=jnp.float32)
    # v8/v9 = clamp_min(., -0.1); v10 = clamp_max(., 0.05)
    v10 = jnp.minimum(jnp.maximum(v7, CLAMP_MIN), CLAMP_MAX)

    # ---- stage 4: MaxPool2d((2,2), stride=(1,2)) == max of 4 one-hot gathers
    #      [Cout2, S2] @ [S2, S3] -> [Cout2, S3]
    m = jnp.dot(v10, msel_ref[0], preferred_element_type=jnp.float32)
    for d in range(1, 4):
        m = jnp.maximum(
            m, jnp.dot(v10, msel_ref[d], preferred_element_type=jnp.float32))
    # v12 = clamp_min(v11, 0.05); v13 = clamp_max(v12, -0.1)
    out_ref[...] = jnp.minimum(jnp.maximum(m, CLAMP_MAX), CLAMP_MIN)


@functools.partial(jax.jit, static_argnames=("groups1", "groups2"))
def model_forward(x_nchw, w1, b1, w2, b2, *, groups1=2, groups2=2):
    """x_nchw: [N, Cin, H, W] float32.  Returns NCHW output like PyTorch."""
    N, Cin, H, W = x_nchw.shape
    Cout1, Cing, K, _ = w1.shape
    G1 = groups1
    Coutg = Cout1 // G1
    Cout2, Cing1, _, _ = w2.shape
    G2 = groups2
    Coutg1 = Cout2 // G2
    assert Cin == G1 * Cing and Cout1 == G2 * Cing1

    # Spatial bookkeeping (conv padding=1).
    Hp, Wp = H + 2, W + 2
    Ho, Wo = Hp - K + 1, Wp - K + 1                   # conv / conv1 output
    Ha, Wa = (Ho - 3) // 2 + 1, (Wo - 3) // 2 + 1     # AvgPool2d(3, stride=2)
    Hm, Wm = Ha - 2 + 1, (Wa - 2) // 2 + 1            # MaxPool2d((2,2),(1,2))
    S1, S2, S3 = N * Ho * Wo, N * Ha * Wa, N * Hm * Wm
    KKC = K * K * Cin

    # ---- layout plumbing (wrapper-side, pure data movement) -----------------
    # NCHW -> NHWC, pad, im2col transposed to [K*K*Cin, S1] so the long
    # flattened-spatial axis lands on TPU lanes inside the kernel.
    x = jnp.transpose(x_nchw, (0, 2, 3, 1)).astype(jnp.float32)
    xpad = jnp.pad(x, ((0, 0), (1, 1), (1, 1), (0, 0)))
    cols = [xpad[:, kh:kh + Ho, kw:kw + Wo, :]
            for kh in range(K) for kw in range(K)]          # each [N,Ho,Wo,Cin]
    patT = jnp.transpose(jnp.stack(cols, axis=0),
                         (0, 4, 1, 2, 3)).reshape(KKC, S1)  # [(kh,kw,ci),(n,h,w)]

    # Block-diagonal grouped-conv weights, transposed: [Cout1, K*K*Cin].
    w1t = jnp.zeros((Cout1, K, K, Cin), jnp.float32)
    for g in range(G1):
        blk = jnp.transpose(w1[g * Coutg:(g + 1) * Coutg],
                            (0, 2, 3, 1))                   # [Coutg,K,K,Cing]
        w1t = w1t.at[g * Coutg:(g + 1) * Coutg, :, :,
                     g * Cing:(g + 1) * Cing].set(blk)
    w1t = w1t.reshape(Cout1, KKC)
    b1c = b1.reshape(Cout1, 1).astype(jnp.float32)

    # Block-diagonal 1x1 grouped-conv weights: [Cout2, Cout1].
    w2t = jnp.zeros((Cout2, Cout1), jnp.float32)
    for g in range(G2):
        w2t = w2t.at[g * Coutg1:(g + 1) * Coutg1,
                     g * Cing1:(g + 1) * Cing1].set(
                         w2[g * Coutg1:(g + 1) * Coutg1, :, 0, 0])
    b2c = b2.reshape(Cout2, 1).astype(jnp.float32)

    # Constant pooling gather matrices (static shapes -> built with numpy).
    avg_m = np.zeros((S1, S2), np.float32)
    for n in range(N):
        for i in range(Ha):
            for j in range(Wa):
                r = (n * Ha + i) * Wa + j
                for dh in range(3):
                    for dw in range(3):
                        c = (n * Ho + 2 * i + dh) * Wo + (2 * j + dw)
                        avg_m[c, r] += 1.0 / 9.0
    max_m = np.zeros((4, S2, S3), np.float32)
    for n in range(N):
        for i in range(Hm):
            for j in range(Wm):
                r = (n * Hm + i) * Wm + j
                for d, (dh, dw) in enumerate(((0, 0), (0, 1), (1, 0), (1, 1))):
                    c = (n * Ha + i + dh) * Wa + (2 * j + dw)
                    max_m[d, c, r] = 1.0

    out_flat = pl.pallas_call(
        _model_kernel,
        out_shape=jax.ShapeDtypeStruct((Cout2, S3), jnp.float32),
        in_specs=[pl.BlockSpec(memory_space=pltpu.MemorySpace.VMEM)] * 7,
        out_specs=pl.BlockSpec(memory_space=pltpu.MemorySpace.VMEM),
    )(patT, w1t, b1c, w2t, b2c, jnp.asarray(avg_m), jnp.asarray(max_m))

    # [Cout2, (n, i, j)] -> NCHW.
    return jnp.transpose(out_flat.reshape(Cout2, N, Hm, Wm), (1, 0, 2, 3))


if __name__ == "__main__":
    key = jax.random.PRNGKey(0)
    k1, k2, k3, k4, k5 = jax.random.split(key, 5)

    # Small, consistent shapes (repaired module config).
    N, Cin, H, W = 2, 4, 16, 16
    Cout1, K, G1 = 8, 5, 2
    Cout2, G2 = 8, 2
    Cing = Cin // G1            # 2
    Cing1 = Cout1 // G2         # 4

    x = jax.random.normal(k1, (N, Cin, H, W), dtype=jnp.float32)

    # Deterministic PyTorch-Conv2d-style uniform init.
    fan1 = Cing * K * K
    bnd1 = 1.0 / (fan1 ** 0.5)
    w1 = jax.random.uniform(k2, (Cout1, Cing, K, K), jnp.float32, -bnd1, bnd1)
    b1 = jax.random.uniform(k3, (Cout1,), jnp.float32, -bnd1, bnd1)
    fan2 = Cing1
    bnd2 = 1.0 / (fan2 ** 0.5)
    w2 = jax.random.uniform(k4, (Cout2, Cing1, 1, 1), jnp.float32, -bnd2, bnd2)
    b2 = jax.random.uniform(k5, (Cout2,), jnp.float32, -bnd2, bnd2)

    out = jax.block_until_ready(model_forward(x, w1, b1, w2, b2))

    assert out.shape == (N, Cout2, 5, 3), out.shape
    assert bool(jnp.all(jnp.isfinite(out)))
    # Faithful to the original clamp chain: v13 = min(max(v11, 0.05), -0.1)
    # is identically -0.1 (the conv/pool pipeline is dead w.r.t. the output).
    assert bool(jnp.allclose(out, CLAMP_MIN))
    print("KERNEL_OK")
</pallas_src>

<mosaic_0001>
module attributes {stable_mosaic.version = 11 : i64} {
  func.func @_model_kernel(%arg0: memref<100x392xf32, #tpu.memory_space<vmem>>, %arg1: memref<8x100xf32, #tpu.memory_space<vmem>>, %arg2: memref<8x1xf32, #tpu.memory_space<vmem>>, %arg3: memref<8x8xf32, #tpu.memory_space<vmem>>, %arg4: memref<8x1xf32, #tpu.memory_space<vmem>>, %arg5: memref<392x72xf32, #tpu.memory_space<vmem>>, %arg6: memref<4x72x30xf32, #tpu.memory_space<vmem>>, %arg7: memref<8x30xf32, #tpu.memory_space<vmem>>) attributes {dimension_semantics = [], scalar_prefetch = 0 : i64, scratch_operands = 0 : i64, tpu.core_type = #tpu.core_type<tc>} {
    %c0 = arith.constant 0 : index
    %c0_0 = arith.constant 0 : index
    %0 = vector.load %arg1[%c0, %c0_0] : memref<8x100xf32, #tpu.memory_space<vmem>>, vector<8x100xf32>
    %c0_1 = arith.constant 0 : index
    %c0_2 = arith.constant 0 : index
    %1 = vector.load %arg0[%c0_1, %c0_2] : memref<100x392xf32, #tpu.memory_space<vmem>>, vector<100x392xf32>
    %cst = arith.constant dense<0.000000e+00> : vector<8x392xf32>
    %2 = tpu.matmul %0, %1, %cst {dimension_numbers = #tpu.dot_dimension_numbers<[1], [0], [0], [1], [0, 0, 1, 1], [], []>} : vector<8x100xf32>, vector<100x392xf32>, vector<8x392xf32> -> vector<8x392xf32>
    %c0_3 = arith.constant 0 : index
    %c0_4 = arith.constant 0 : index
    %3 = vector.load %arg2[%c0_3, %c0_4] : memref<8x1xf32, #tpu.memory_space<vmem>>, vector<8x1xf32>
    %4 = vector.broadcast %3 : vector<8x1xf32> to vector<8x392xf32>
    %5 = arith.addf %2, %4 : vector<8x392xf32>
    %cst_5 = arith.constant 5.000000e-02 : f32
    %6 = vector.broadcast %cst_5 : f32 to vector<8x392xf32>
    %7 = arith.minimumf %5, %6 : vector<8x392xf32>
    %c0_6 = arith.constant 0 : index
    %c0_7 = arith.constant 0 : index
    %8 = vector.load %arg3[%c0_6, %c0_7] : memref<8x8xf32, #tpu.memory_space<vmem>>, vector<8x8xf32>
    %cst_8 = arith.constant dense<0.000000e+00> : vector<8x392xf32>
    %9 = tpu.matmul %8, %7, %cst_8 {dimension_numbers = #tpu.dot_dimension_numbers<[1], [0], [0], [1], [0, 0, 1, 1], [], []>} : vector<8x8xf32>, vector<8x392xf32>, vector<8x392xf32> -> vector<8x392xf32>
    %c0_9 = arith.constant 0 : index
    %c0_10 = arith.constant 0 : index
    %10 = vector.load %arg4[%c0_9, %c0_10] : memref<8x1xf32, #tpu.memory_space<vmem>>, vector<8x1xf32>
    %11 = vector.broadcast %10 : vector<8x1xf32> to vector<8x392xf32>
    %12 = arith.addf %9, %11 : vector<8x392xf32>
    %cst_11 = arith.constant 5.000000e-02 : f32
    %13 = vector.broadcast %cst_11 : f32 to vector<8x392xf32>
    %14 = arith.maximumf %12, %13 : vector<8x392xf32>
    %c0_12 = arith.constant 0 : index
    %c0_13 = arith.constant 0 : index
    %15 = vector.load %arg5[%c0_12, %c0_13] : memref<392x72xf32, #tpu.memory_space<vmem>>, vector<392x72xf32>
    %cst_14 = arith.constant dense<0.000000e+00> : vector<8x72xf32>
    %16 = tpu.matmul %14, %15, %cst_14 {dimension_numbers = #tpu.dot_dimension_numbers<[1], [0], [0], [1], [0, 0, 1, 1], [], []>} : vector<8x392xf32>, vector<392x72xf32>, vector<8x72xf32> -> vector<8x72xf32>
    %cst_15 = arith.constant -1.000000e-01 : f32
    %17 = vector.broadcast %cst_15 : f32 to vector<8x72xf32>
    %18 = arith.maximumf %16, %17 : vector<8x72xf32>
    %cst_16 = arith.constant 5.000000e-02 : f32
    %19 = vector.broadcast %cst_16 : f32 to vector<8x72xf32>
    %20 = arith.minimumf %18, %19 : vector<8x72xf32>
    %c0_17 = arith.constant 0 : index
    %c0_18 = arith.constant 0 : index
    %c0_19 = arith.constant 0 : index
    %21 = vector.load %arg6[%c0_17, %c0_18, %c0_19] : memref<4x72x30xf32, #tpu.memory_space<vmem>>, vector<1x72x30xf32>
    %22 = vector.shape_cast %21 : vector<1x72x30xf32> to vector<72x30xf32>
    %cst_20 = arith.constant dense<0.000000e+00> : vector<8x30xf32>
    %23 = tpu.matmul %20, %22, %cst_20 {dimension_numbers = #tpu.dot_dimension_numbers<[1], [0], [0], [1], [0, 0, 1, 1], [], []>} : vector<8x72xf32>, vector<72x30xf32>, vector<8x30xf32> -> vector<8x30xf32>
    %c1 = arith.constant 1 : index
    %c0_21 = arith.constant 0 : index
    %c0_22 = arith.constant 0 : index
    %24 = vector.load %arg6[%c1, %c0_21, %c0_22] : memref<4x72x30xf32, #tpu.memory_space<vmem>>, vector<1x72x30xf32>
    %25 = vector.shape_cast %24 : vector<1x72x30xf32> to vector<72x30xf32>
    %cst_23 = arith.constant dense<0.000000e+00> : vector<8x30xf32>
    %26 = tpu.matmul %20, %25, %cst_23 {dimension_numbers = #tpu.dot_dimension_numbers<[1], [0], [0], [1], [0, 0, 1, 1], [], []>} : vector<8x72xf32>, vector<72x30xf32>, vector<8x30xf32> -> vector<8x30xf32>
    %27 = arith.maximumf %23, %26 : vector<8x30xf32>
    %c2 = arith.constant 2 : index
    %c0_24 = arith.constant 0 : index
    %c0_25 = arith.constant 0 : index
    %28 = vector.load %arg6[%c2, %c0_24, %c0_25] : memref<4x72x30xf32, #tpu.memory_space<vmem>>, vector<1x72x30xf32>
    %29 = vector.shape_cast %28 : vector<1x72x30xf32> to vector<72x30xf32>
    %cst_26 = arith.constant dense<0.000000e+00> : vector<8x30xf32>
    %30 = tpu.matmul %20, %29, %cst_26 {dimension_numbers = #tpu.dot_dimension_numbers<[1], [0], [0], [1], [0, 0, 1, 1], [], []>} : vector<8x72xf32>, vector<72x30xf32>, vector<8x30xf32> -> vector<8x30xf32>
    %31 = arith.maximumf %27, %30 : vector<8x30xf32>
    %c3 = arith.constant 3 : index
    %c0_27 = arith.constant 0 : index
    %c0_28 = arith.constant 0 : index
    %32 = vector.load %arg6[%c3, %c0_27, %c0_28] : memref<4x72x30xf32, #tpu.memory_space<vmem>>, vector<1x72x30xf32>
    %33 = vector.shape_cast %32 : vector<1x72x30xf32> to vector<72x30xf32>
    %cst_29 = arith.constant dense<0.000000e+00> : vector<8x30xf32>
    %34 = tpu.matmul %20, %33, %cst_29 {dimension_numbers = #tpu.dot_dimension_numbers<[1], [0], [0], [1], [0, 0, 1, 1], [], []>} : vector<8x72xf32>, vector<72x30xf32>, vector<8x30xf32> -> vector<8x30xf32>
    %35 = arith.maximumf %31, %34 : vector<8x30xf32>
    %cst_30 = arith.constant 5.000000e-02 : f32
    %36 = vector.broadcast %cst_30 : f32 to vector<8x30xf32>
    %37 = arith.maximumf %35, %36 : vector<8x30xf32>
    %cst_31 = arith.constant -1.000000e-01 : f32
    %38 = vector.broadcast %cst_31 : f32 to vector<8x30xf32>
    %39 = arith.minimumf %37, %38 : vector<8x30xf32>
    %c0_32 = arith.constant 0 : index
    %c0_33 = arith.constant 0 : index
    %40 = vector.load %arg7[%c0_32, %c0_33] : memref<8x30xf32, #tpu.memory_space<vmem>>, vector<8x30xf32>
    tpu.vector_store %arg7[%c0_32, %c0_33], %39 {strides = array<i32>} : memref<8x30xf32, #tpu.memory_space<vmem>>, vector<8x30xf32>,
    return
  }
}

</mosaic_0001>

<llo_original>
// kernel: model_forward.1
$region0: #{model_forward.1}
  #allocation0 [shape = 'u32[]', space=smem, size = 0x4, offset = 0x4, fixed_abs, tag = 'smem constant byte address 0x4 - core index']
  #allocation1 [shape = 'u32[144,128]{1,0:T(1,128)}', space=vmem, size = 0x12000, scoped, tag = 'internal scratch']
  %s0 = inlined_call_operand.vmem [shape: f32[100,392], index: 0, kind: input, shape index: {}]
  %s1 = inlined_call_operand.vmem [shape: f32[8,100], index: 1, kind: input, shape index: {}]
  %s2 = inlined_call_operand.vmem [shape: f32[8,1], index: 2, kind: input, shape index: {}]
  %s3 = inlined_call_operand.vmem [shape: f32[8,8], index: 3, kind: input, shape index: {}]
  %s4 = inlined_call_operand.vmem [shape: f32[8,1], index: 4, kind: input, shape index: {}]
  %s5 = inlined_call_operand.vmem [shape: f32[392,72], index: 5, kind: input, shape index: {}]
  %s6 = inlined_call_operand.vmem [shape: f32[4,72,30], index: 6, kind: input, shape index: {}]
  %s7 = inlined_call_operand.vmem [shape: f32[8,30], index: 7, kind: output, shape index: {}]
  %s8 = sld [smem:[#allocation0]]
  $region38: #{model_forward.1} parent=0
    _
  %s10 = ssub.s32 1, %s8
  %s11 = scalar_select 0, %s10, %s8
  // Predicated region
  $region2: #{model_forward.1} parent=0 // pred_check
    _
  $region3: #{model_forward.1} parent=0 // pred_check_branch
    %13 = sbr.rel (0) target = $region5
  $region4: #{model_forward.1} parent=0 // pred_region
    _
  $region5: #{model_forward.1} parent=0 // pred_fallthru
    _
  // Predicated region
  $region6: #{model_forward.1} parent=0 // pred_check
    _
  $region7: #{model_forward.1} parent=0 // pred_check_branch
    %15 = sbr.rel (0) target = $region9
  $region8: #{model_forward.1} parent=0 // pred_region
    _
  $region9: #{model_forward.1} parent=0 // pred_fallthru
    _
  // Predicated region
  $region10: #{model_forward.1} parent=0 // pred_check
    _
  $region11: #{model_forward.1} parent=0 // pred_check_branch
    %17 = sbr.rel (0) target = $region13
  $region12: #{model_forward.1} parent=0 // pred_region
    _
  $region13: #{model_forward.1} parent=0 // pred_fallthru
    _
  // Predicated region
  $region14: #{model_forward.1} parent=0 // pred_check
    _
  $region15: #{model_forward.1} parent=0 // pred_check_branch
    %19 = sbr.rel (0) target = $region17
  $region16: #{model_forward.1} parent=0 // pred_region
    _
  $region17: #{model_forward.1} parent=0 // pred_fallthru
    _
  // Predicated region
  $region18: #{model_forward.1} parent=0 // pred_check
    _
  $region19: #{model_forward.1} parent=0 // pred_check_branch
    %21 = sbr.rel (0) target = $region21
  $region20: #{model_forward.1} parent=0 // pred_region
    _
  $region21: #{model_forward.1} parent=0 // pred_fallthru
    _
  // Predicated region
  $region22: #{model_forward.1} parent=0 // pred_check
    _
  $region23: #{model_forward.1} parent=0 // pred_check_branch
    %23 = sbr.rel (0) target = $region25
  $region24: #{model_forward.1} parent=0 // pred_region
    _
  $region25: #{model_forward.1} parent=0 // pred_fallthru
    _
  // Predicated region
  $region26: #{model_forward.1} parent=0 // pred_check
    _
  $region27: #{model_forward.1} parent=0 // pred_check_branch
    %25 = sbr.rel (0) target = $region29
  $region28: #{model_forward.1} parent=0 // pred_region
    _
  $region29: #{model_forward.1} parent=0 // pred_fallthru
    _
  %v26 = vld [vmem:[%s1] sm:$0xff]
  %v27 = vld [vmem:[%s0] sm:$0xff]
  %v28 = vld [vmem:[%s0 + $0x8] sm:$0xff]
  %v29 = vld [vmem:[%s0 + $0x10] sm:$0xff]
  %v30 = vld [vmem:[%s0 + $0x18] sm:$0xff]
  %v31 = vld [vmem:[%s0 + $0x20] sm:$0xff]
  %v32 = vld [vmem:[%s0 + $0x28] sm:$0xff]
  %v33 = vld [vmem:[%s0 + $0x30] sm:$0xff]
  %v34 = vld [vmem:[%s0 + $0x38] sm:$0xff]
  %v35 = vld [vmem:[%s0 + $0x40] sm:$0xff]
  %v36 = vld [vmem:[%s0 + $0x48] sm:$0xff]
  %v37 = vld [vmem:[%s0 + $0x50] sm:$0xff]
  %v38 = vld [vmem:[%s0 + $0x58] sm:$0xff]
  %v39 = vld [vmem:[%s0 + $0x60] sm:$0xff]
  %v40 = vld [vmem:[%s0 + $0x68] sm:$0xff]
  %v41 = vld [vmem:[%s0 + $0x70] sm:$0xff]
  %v42 = vld [vmem:[%s0 + $0x78] sm:$0xff]
  %v43 = vld [vmem:[%s0 + $0x80] sm:$0xff]
  %v44 = vld [vmem:[%s0 + $0x88] sm:$0xff]
  %v45 = vld [vmem:[%s0 + $0x90] sm:$0xff]
  %v46 = vld [vmem:[%s0 + $0x98] sm:$0xff]
  %v47 = vld [vmem:[%s0 + $0xa0] sm:$0xff]
  %v48 = vld [vmem:[%s0 + $0xa8] sm:$0xff]
  %v49 = vld [vmem:[%s0 + $0xb0] sm:$0xff]
  %v50 = vld [vmem:[%s0 + $0xb8] sm:$0xff]
  %v51 = vld [vmem:[%s0 + $0xc0] sm:$0xff]
  %v52 = vld [vmem:[%s0 + $0xc8] sm:$0xff]
  %v53 = vld [vmem:[%s0 + $0xd0] sm:$0xff]
  %v54 = vld [vmem:[%s0 + $0xd8] sm:$0xff]
  %v55 = vld [vmem:[%s0 + $0xe0] sm:$0xff]
  %v56 = vld [vmem:[%s0 + $0xe8] sm:$0xff]
  %v57 = vld [vmem:[%s0 + $0xf0] sm:$0xff]
  %v58 = vld [vmem:[%s0 + $0xf8] sm:$0xff]
  %v59 = vld [vmem:[%s0 + $0x100] sm:$0xff]
  %v60 = vld [vmem:[%s0 + $0x108] sm:$0xff]
  %v61 = vld [vmem:[%s0 + $0x110] sm:$0xff]
  %v62 = vld [vmem:[%s0 + $0x118] sm:$0xff]
  %v63 = vld [vmem:[%s0 + $0x120] sm:$0xff]
  %v64 = vld [vmem:[%s0 + $0x128] sm:$0xff]
  %v65 = vld [vmem:[%s0 + $0x130] sm:$0xff]
  %v66 = vld [vmem:[%s0 + $0x138] sm:$0xff]
  %v67 = vld [vmem:[%s0 + $0x140] sm:$0xff]
  %v68 = vld [vmem:[%s0 + $0x148] sm:$0xff]
  %v69 = vld [vmem:[%s0 + $0x150] sm:$0xff]
  %v70 = vld [vmem:[%s0 + $0x158] sm:$0xff]
  %v71 = vld [vmem:[%s0 + $0x160] sm:$0xff]
  %v72 = vld [vmem:[%s0 + $0x168] sm:$0xff]
  %v73 = vld [vmem:[%s0 + $0x170] sm:$0xff]
  %v74 = vld [vmem:[%s0 + $0x178] sm:$0xff]
  %v75 = vld [vmem:[%s0 + $0x180] sm:$0xf]
  %v76 = vld [vmem:[%s0 + $0x188] sm:$0xf]
  %v77 = vld [vmem:[%s0 + $0x190] sm:$0xf]
  %v78 = vld [vmem:[%s0 + $0x198] sm:$0xf]
  %v79 = vld [vmem:[%s2] sm:$0xff]
  %81 = vset.pattern.permute.xlu0 0
  %82 = vperm.xlu0 %81, %v79
  %v83 = vpop.permute.xlu0 %82
  %vm85 = vcmask 818176
  %v87 = vsel %vm85, %v26, 0
  %vm89 = vcmask 1043456
  %v91 = vsel %vm89, %v75, 0
  %v94 = vsel %vm89, %v76, 0
  %v97 = vsel %vm89, %v77, 0
  %v100 = vsel %vm89, %v78, 0
  %102 = vmatprep.subr.mxu0 0.0
  %103 = vmatpush1.msra.mxu0 0.0
  %104 = vmatprep.subr.mxu0 0.0
  %105 = vmatpush1.msra.mxu0 0.0
  %106 = vmatprep.subr.mxu0 0.0
  %107 = vmatpush1.msra.mxu0 0.0
  %108 = vmatprep.subr.mxu0 %v94
  %109 = vmatpush1.msra.mxu0 %v91
  %110 = vmatprep.subr.mxu0 %v72
  %111 = vmatpush1.msra.mxu0 %v71
  %112 = vmatprep.subr.mxu0 %v68
  %113 = vmatpush1.msra.mxu0 %v67
  %114 = vmatprep.subr.mxu0 %v64
  %115 = vmatpush1.msra.mxu0 %v63
  %116 = vmatprep.subr.mxu0 %v60
  %117 = vmatpush1.msra.mxu0 %v59
  %118 = vmatprep.subr.mxu0 %v56
  %119 = vmatpush1.msra.mxu0 %v55
  %120 = vmatprep.subr.mxu0 %v52
  %121 = vmatpush1.msra.mxu0 %v51
  %122 = vmatprep.subr.mxu0 %v48
  %123 = vmatpush1.msra.mxu0 %v47
  %124 = vmatprep.subr.mxu0 %v44
  %125 = vmatpush1.msra.mxu0 %v43
  %126 = vmatprep.subr.mxu0 %v40
  %127 = vmatpush1.msra.mxu0 %v39
  %128 = vmatprep.subr.mxu0 %v36
  %129 = vmatpush1.msra.mxu0 %v35
  %130 = vmatprep.subr.mxu0 %v32
  %131 = vmatpush1.msra.mxu0 %v31
  %132 = vmatprep.subr.mxu0 %v28
  %133 = vmatpush1.msra.mxu0 %v27
  %134 = vmatprep.subr.mxu0 0.0
  %135 = vmatpush2.msra.mxu0 0.0
  %136 = vmatprep.subr.mxu0 0.0
  %137 = vmatpush2.msra.mxu0 0.0
  %138 = vmatprep.subr.mxu0 0.0
  %139 = vmatpush2.msra.mxu0 0.0
  %140 = vmatprep.subr.mxu0 0.0
  %141 = vmatpush2.msra.mxu0 0.0
  %142 = vmatprep.subr.mxu0 0.0
  %143 = vmatpush2.msra.mxu0 0.0
  %144 = vmatprep.subr.mxu0 0.0
  %145 = vmatpush2.msra.mxu0 0.0
  %146 = vmatprep.subr.mxu0 0.0
  %147 = vmatpush2.msra.mxu0 0.0
  %148 = vmatprep.subr.mxu0 0.0
  %149 = vmatpush2.msra.mxu0 0.0
  %150 = vmatprep.subr.mxu0 0.0
  %151 = vmatpush2.msra.mxu0 0.0
  %152 = vmatprep.subr.mxu0 0.0
  %153 = vmatpush2.msra.mxu0 0.0
  %154 = vmatprep.subr.mxu0 0.0
  %155 = vmatpush2.msra.mxu0 0.0
  %156 = vmatprep.subr.mxu0 0.0
  %157 = vmatpush2.msra.mxu0 0.0
  %158 = vmatprep.subr.mxu0 0.0
  %159 = vmatpush2.msra.mxu0 0.0
  %160 = vmatprep.subr.mxu0 0.0
  %161 = vmatpush2.msra.mxu0 0.0
  %162 = vmatprep.subr.mxu0 0.0
  %163 = vmatpush2.msra.mxu0 0.0
  %164 = vmatprep.subr.mxu0 0.0
  %165 = vmatpush2.msra.mxu0 0.0
  %166 = vmatprep.mubr.f32.mxu0 0.0
  %167 = vmatmul.mubr.f32.gmra.mxu0 %v87
  %v168 = vpop.f32.mrf.mxu0
  %v169 = vadd.f32 %v83, %v168
  %v170 = vpop.f32.mrf.mxu0
  %v171 = vadd.f32 %v83, %v170
  %172 = vdwg.mxu0
  %173 = vmatprep.subr.mxu0 0.0
  %174 = vmatpush1.msra.mxu0 0.0
  %175 = vmatprep.subr.mxu0 0.0
  %176 = vmatpush1.msra.mxu0 0.0
  %177 = vmatprep.subr.mxu0 0.0
  %178 = vmatpush1.msra.mxu0 0.0
  %179 = vmatprep.subr.mxu0 %v100
  %180 = vmatpush1.msra.mxu0 %v97
  %181 = vmatprep.subr.mxu0 %v74
  %182 = vmatpush1.msra.mxu0 %v73
  %183 = vmatprep.subr.mxu0 %v70
  %184 = vmatpush1.msra.mxu0 %v69
  %185 = vmatprep.subr.mxu0 %v66
  %186 = vmatpush1.msra.mxu0 %v65
  %187 = vmatprep.subr.mxu0 %v62
  %188 = vmatpush1.msra.mxu0 %v61
  %189 = vmatprep.subr.mxu0 %v58
  %190 = vmatpush1.msra.mxu0 %v57
  %191 = vmatprep.subr.mxu0 %v54
  %192 = vmatpush1.msra.mxu0 %v53
  %193 = vmatprep.subr.mxu0 %v50
  %194 = vmatpush1.msra.mxu0 %v49
  %195 = vmatprep.subr.mxu0 %v46
  %196 = vmatpush1.msra.mxu0 %v45
  %197 = vmatprep.subr.mxu0 %v42
  %198 = vmatpush1.msra.mxu0 %v41
  %199 = vmatprep.subr.mxu0 %v38
  %200 = vmatpush1.msra.mxu0 %v37
  %201 = vmatprep.subr.mxu0 %v34
  %202 = vmatpush1.msra.mxu0 %v33
  %203 = vmatprep.subr.mxu0 %v30
  %204 = vmatpush1.msra.mxu0 %v29
  %205 = vmatprep.subr.mxu0 0.0
  %206 = vmatpush2.msra.mxu0 0.0
  %207 = vmatprep.subr.mxu0 0.0
  %208 = vmatpush2.msra.mxu0 0.0
  %209 = vmatprep.subr.mxu0 0.0
  %210 = vmatpush2.msra.mxu0 0.0
  %211 = vmatprep.subr.mxu0 0.0
  %212 = vmatpush2.msra.mxu0 0.0
  %213 = vmatprep.subr.mxu0 0.0
  %214 = vmatpush2.msra.mxu0 0.0
  %215 = vmatprep.subr.mxu0 0.0
  %216 = vmatpush2.msra.mxu0 0.0
  %217 = vmatprep.subr.mxu0 0.0
  %218 = vmatpush2.msra.mxu0 0.0
  %219 = vmatprep.subr.mxu0 0.0
  %220 = vmatpush2.msra.mxu0 0.0
  %221 = vmatprep.subr.mxu0 0.0
  %222 = vmatpush2.msra.mxu0 0.0
  %223 = vmatprep.subr.mxu0 0.0
  %224 = vmatpush2.msra.mxu0 0.0
  %225 = vmatprep.subr.mxu0 0.0
  %226 = vmatpush2.msra.mxu0 0.0
  %227 = vmatprep.subr.mxu0 0.0
  %228 = vmatpush2.msra.mxu0 0.0
  %229 = vmatprep.subr.mxu0 0.0
  %230 = vmatpush2.msra.mxu0 0.0
  %231 = vmatprep.subr.mxu0 0.0
  %232 = vmatpush2.msra.mxu0 0.0
  %233 = vmatprep.subr.mxu0 0.0
  %234 = vmatpush2.msra.mxu0 0.0
  %235 = vmatprep.subr.mxu0 0.0
  %236 = vmatpush2.msra.mxu0 0.0
  %237 = vmatprep.mubr.f32.mxu0 0.0
  %238 = vmatmul.mubr.f32.gmra.mxu0 %v87
  %v239 = vpop.f32.mrf.mxu0
  %v240 = vadd.f32 %v83, %v239
  %v241 = vpop.f32.mrf.mxu0
  %v242 = vadd.f32 %v83, %v241
  %243 = vdwg.mxu0
  %v244 = vmin.f32 %v169, 0.05
  %v245 = vmin.f32 %v171, 0.05
  %v246 = vmin.f32 %v240, 0.05
  %v247 = vmin.f32 %v242, 0.05
  %v248 = vld [vmem:[%s3] sm:$0xff]
  %v249 = vld [vmem:[%s4] sm:$0xff]
  %251 = vset.pattern.permute.xlu0 0
  %252 = vperm.xlu0 %251, %v249
  %v253 = vpop.permute.xlu0 %252
  %vm255 = vcmask 64512
  %v257 = vsel %vm255, %v248, 0
  %259 = vmatprep.subr.mxu0 0.0
  %260 = vmatpush1.msra.mxu0 0.0
  %261 = vmatprep.subr.mxu0 0.0
  %262 = vmatpush1.msra.mxu0 0.0
  %263 = vmatprep.subr.mxu0 0.0
  %264 = vmatpush1.msra.mxu0 0.0
  %265 = vmatprep.subr.mxu0 0.0
  %266 = vmatpush1.msra.mxu0 0.0
  %267 = vmatprep.subr.mxu0 0.0
  %268 = vmatpush1.msra.mxu0 0.0
  %269 = vmatprep.subr.mxu0 0.0
  %270 = vmatpush1.msra.mxu0 0.0
  %271 = vmatprep.subr.mxu0 0.0
  %272 = vmatpush1.msra.mxu0 0.0
  %273 = vmatprep.subr.mxu0 0.0
  %274 = vmatpush1.msra.mxu0 0.0
  %275 = vmatprep.subr.mxu0 0.0
  %276 = vmatpush1.msra.mxu0 0.0
  %277 = vmatprep.subr.mxu0 0.0
  %278 = vmatpush1.msra.mxu0 0.0
  %279 = vmatprep.subr.mxu0 0.0
  %280 = vmatpush1.msra.mxu0 0.0
  %281 = vmatprep.subr.mxu0 0.0
  %282 = vmatpush1.msra.mxu0 0.0
  %283 = vmatprep.subr.mxu0 0.0
  %284 = vmatpush1.msra.mxu0 0.0
  %285 = vmatprep.subr.mxu0 0.0
  %286 = vmatpush1.msra.mxu0 0.0
  %287 = vmatprep.subr.mxu0 0.0
  %288 = vmatpush1.msra.mxu0 0.0
  %289 = vmatprep.subr.mxu0 %v245
  %290 = vmatpush1.msra.mxu0 %v244
  %291 = vmatprep.subr.mxu0 0.0
  %292 = vmatpush2.msra.mxu0 0.0
  %293 = vmatprep.subr.mxu0 0.0
  %294 = vmatpush2.msra.mxu0 0.0
  %295 = vmatprep.subr.mxu0 0.0
  %296 = vmatpush2.msra.mxu0 0.0
  %297 = vmatprep.subr.mxu0 0.0
  %298 = vmatpush2.msra.mxu0 0.0
  %299 = vmatprep.subr.mxu0 0.0
  %300 = vmatpush2.msra.mxu0 0.0
  %301 = vmatprep.subr.mxu0 0.0
  %302 = vmatpush2.msra.mxu0 0.0
  %303 = vmatprep.subr.mxu0 0.0
  %304 = vmatpush2.msra.mxu0 0.0
  %305 = vmatprep.subr.mxu0 0.0
  %306 = vmatpush2.msra.mxu0 0.0
  %307 = vmatprep.subr.mxu0 0.0
  %308 = vmatpush2.msra.mxu0 0.0
  %309 = vmatprep.subr.mxu0 0.0
  %310 = vmatpush2.msra.mxu0 0.0
  %311 = vmatprep.subr.mxu0 0.0
  %312 = vmatpush2.msra.mxu0 0.0
  %313 = vmatprep.subr.mxu0 0.0
  %314 = vmatpush2.msra.mxu0 0.0
  %315 = vmatprep.subr.mxu0 0.0
  %316 = vmatpush2.msra.mxu0 0.0
  %317 = vmatprep.subr.mxu0 0.0
  %318 = vmatpush2.msra.mxu0 0.0
  %319 = vmatprep.subr.mxu0 0.0
  %320 = vmatpush2.msra.mxu0 0.0
  %321 = vmatprep.subr.mxu0 0.0
  %322 = vmatpush2.msra.mxu0 0.0
  %323 = vmatprep.mubr.f32.mxu0 0.0
  %324 = vmatmul.mubr.f32.gmra.mxu0 %v257
  %v325 = vpop.f32.mrf.mxu0
  %v326 = vadd.f32 %v253, %v325
  %v327 = vpop.f32.mrf.mxu0
  %v328 = vadd.f32 %v253, %v327
  %329 = vdwg.mxu0
  %330 = vmatprep.subr.mxu0 0.0
  %331 = vmatpush1.msra.mxu0 0.0
  %332 = vmatprep.subr.mxu0 0.0
  %333 = vmatpush1.msra.mxu0 0.0
  %334 = vmatprep.subr.mxu0 0.0
  %335 = vmatpush1.msra.mxu0 0.0
  %336 = vmatprep.subr.mxu0 0.0
  %337 = vmatpush1.msra.mxu0 0.0
  %338 = vmatprep.subr.mxu0 0.0
  %339 = vmatpush1.msra.mxu0 0.0
  %340 = vmatprep.subr.mxu0 0.0
  %341 = vmatpush1.msra.mxu0 0.0
  %342 = vmatprep.subr.mxu0 0.0
  %343 = vmatpush1.msra.mxu0 0.0
  %344 = vmatprep.subr.mxu0 0.0
  %345 = vmatpush1.msra.mxu0 0.0
  %346 = vmatprep.subr.mxu0 0.0
  %347 = vmatpush1.msra.mxu0 0.0
  %348 = vmatprep.subr.mxu0 0.0
  %349 = vmatpush1.msra.mxu0 0.0
  %350 = vmatprep.subr.mxu0 0.0
  %351 = vmatpush1.msra.mxu0 0.0
  %352 = vmatprep.subr.mxu0 0.0
  %353 = vmatpush1.msra.mxu0 0.0
  %354 = vmatprep.subr.mxu0 0.0
  %355 = vmatpush1.msra.mxu0 0.0
  %356 = vmatprep.subr.mxu0 0.0
  %357 = vmatpush1.msra.mxu0 0.0
  %358 = vmatprep.subr.mxu0 0.0
  %359 = vmatpush1.msra.mxu0 0.0
  %360 = vmatprep.subr.mxu0 %v247
  %361 = vmatpush1.msra.mxu0 %v246
  %362 = vmatprep.subr.mxu0 0.0
  %363 = vmatpush2.msra.mxu0 0.0
  %364 = vmatprep.subr.mxu0 0.0
  %365 = vmatpush2.msra.mxu0 0.0
  %366 = vmatprep.subr.mxu0 0.0
  %367 = vmatpush2.msra.mxu0 0.0
  %368 = vmatprep.subr.mxu0 0.0
  %369 = vmatpush2.msra.mxu0 0.0
  %370 = vmatprep.subr.mxu0 0.0
  %371 = vmatpush2.msra.mxu0 0.0
  %372 = vmatprep.subr.mxu0 0.0
  %373 = vmatpush2.msra.mxu0 0.0
  %374 = vmatprep.subr.mxu0 0.0
  %375 = vmatpush2.msra.mxu0 0.0
  %376 = vmatprep.subr.mxu0 0.0
  %377 = vmatpush2.msra.mxu0 0.0
  %378 = vmatprep.subr.mxu0 0.0
  %379 = vmatpush2.msra.mxu0 0.0
  %380 = vmatprep.subr.mxu0 0.0
  %381 = vmatpush2.msra.mxu0 0.0
  %382 = vmatprep.subr.mxu0 0.0
  %383 = vmatpush2.msra.mxu0 0.0
  %384 = vmatprep.subr.mxu0 0.0
  %385 = vmatpush2.msra.mxu0 0.0
  %386 = vmatprep.subr.mxu0 0.0
  %387 = vmatpush2.msra.mxu0 0.0
  %388 = vmatprep.subr.mxu0 0.0
  %389 = vmatpush2.msra.mxu0 0.0
  %390 = vmatprep.subr.mxu0 0.0
  %391 = vmatpush2.msra.mxu0 0.0
  %392 = vmatprep.subr.mxu0 0.0
  %393 = vmatpush2.msra.mxu0 0.0
  %394 = vmatprep.mubr.f32.mxu0 0.0
  %395 = vmatmul.mubr.f32.gmra.mxu0 %v257
  %v396 = vpop.f32.mrf.mxu0
  %v397 = vadd.f32 %v253, %v396
  %v398 = vpop.f32.mrf.mxu0
  %v399 = vadd.f32 %v253, %v398
  %400 = vdwg.mxu0
  %v401 = vmax.f32 %v326, 0.05
  %v402 = vmax.f32 %v328, 0.05
  %v403 = vmax.f32 %v397, 0.05
  %v404 = vmax.f32 %v399, 0.05
  %v405 = vld [vmem:[%s5] sm:$0xff]
  %v406 = vld [vmem:[%s5 + $0x8] sm:$0xff]
  %v407 = vld [vmem:[%s5 + $0x10] sm:$0xff]
  %v408 = vld [vmem:[%s5 + $0x18] sm:$0xff]
  %v409 = vld [vmem:[%s5 + $0x20] sm:$0xff]
  %v410 = vld [vmem:[%s5 + $0x28] sm:$0xff]
  %v411 = vld [vmem:[%s5 + $0x30] sm:$0xff]
  %v412 = vld [vmem:[%s5 + $0x38] sm:$0xff]
  %v413 = vld [vmem:[%s5 + $0x40] sm:$0xff]
  %v414 = vld [vmem:[%s5 + $0x48] sm:$0xff]
  %v415 = vld [vmem:[%s5 + $0x50] sm:$0xff]
  %v416 = vld [vmem:[%s5 + $0x58] sm:$0xff]
  %v417 = vld [vmem:[%s5 + $0x60] sm:$0xff]
  %v418 = vld [vmem:[%s5 + $0x68] sm:$0xff]
  %v419 = vld [vmem:[%s5 + $0x70] sm:$0xff]
  %v420 = vld [vmem:[%s5 + $0x78] sm:$0xff]
  %v421 = vld [vmem:[%s5 + $0x80] sm:$0xff]
  %v422 = vld [vmem:[%s5 + $0x88] sm:$0xff]
  %v423 = vld [vmem:[%s5 + $0x90] sm:$0xff]
  %v424 = vld [vmem:[%s5 + $0x98] sm:$0xff]
  %v425 = vld [vmem:[%s5 + $0xa0] sm:$0xff]
  %v426 = vld [vmem:[%s5 + $0xa8] sm:$0xff]
  %v427 = vld [vmem:[%s5 + $0xb0] sm:$0xff]
  %v428 = vld [vmem:[%s5 + $0xb8] sm:$0xff]
  %v429 = vld [vmem:[%s5 + $0xc0] sm:$0xff]
  %v430 = vld [vmem:[%s5 + $0xc8] sm:$0xff]
  %v431 = vld [vmem:[%s5 + $0xd0] sm:$0xff]
  %v432 = vld [vmem:[%s5 + $0xd8] sm:$0xff]
  %v433 = vld [vmem:[%s5 + $0xe0] sm:$0xff]
  %v434 = vld [vmem:[%s5 + $0xe8] sm:$0xff]
  %v435 = vld [vmem:[%s5 + $0xf0] sm:$0xff]
  %v436 = vld [vmem:[%s5 + $0xf8] sm:$0xff]
  %v437 = vld [vmem:[%s5 + $0x100] sm:$0xff]
  %v438 = vld [vmem:[%s5 + $0x108] sm:$0xff]
  %v439 = vld [vmem:[%s5 + $0x110] sm:$0xff]
  %v440 = vld [vmem:[%s5 + $0x118] sm:$0xff]
  %v441 = vld [vmem:[%s5 + $0x120] sm:$0xff]
  %v442 = vld [vmem:[%s5 + $0x128] sm:$0xff]
  %v443 = vld [vmem:[%s5 + $0x130] sm:$0xff]
  %v444 = vld [vmem:[%s5 + $0x138] sm:$0xff]
  %v445 = vld [vmem:[%s5 + $0x140] sm:$0xff]
  %v446 = vld [vmem:[%s5 + $0x148] sm:$0xff]
  %v447 = vld [vmem:[%s5 + $0x150] sm:$0xff]
  %v448 = vld [vmem:[%s5 + $0x158] sm:$0xff]
  %v449 = vld [vmem:[%s5 + $0x160] sm:$0xff]
  %v450 = vld [vmem:[%s5 + $0x168] sm:$0xff]
  %v451 = vld [vmem:[%s5 + $0x170] sm:$0xff]
  %v452 = vld [vmem:[%s5 + $0x178] sm:$0xff]
  %v453 = vld [vmem:[%s5 + $0x180] sm:$0xff]
  %v455 = vsel %vm255, %v404, 0
  %457 = vmatprep.subr.mxu0 0.0
  %458 = vmatpush1.msra.mxu0 %v420
  %459 = vmatprep.subr.mxu0 0.0
  %460 = vmatpush1.msra.mxu0 %v419
  %461 = vmatprep.subr.mxu0 0.0
  %462 = vmatpush1.msra.mxu0 %v418
  %463 = vmatprep.subr.mxu0 0.0
  %464 = vmatpush1.msra.mxu0 %v417
  %465 = vmatprep.subr.mxu0 0.0
  %466 = vmatpush1.msra.mxu0 %v416
  %467 = vmatprep.subr.mxu0 0.0
  %468 = vmatpush1.msra.mxu0 %v415
  %469 = vmatprep.subr.mxu0 0.0
  %470 = vmatpush1.msra.mxu0 %v414
  %471 = vmatprep.subr.mxu0 0.0
  %472 = vmatpush1.msra.mxu0 %v413
  %473 = vmatprep.subr.mxu0 0.0
  %474 = vmatpush1.msra.mxu0 %v412
  %475 = vmatprep.subr.mxu0 0.0
  %476 = vmatpush1.msra.mxu0 %v411
  %477 = vmatprep.subr.mxu0 0.0
  %478 = vmatpush1.msra.mxu0 %v410
  %479 = vmatprep.subr.mxu0 0.0
  %480 = vmatpush1.msra.mxu0 %v409
  %481 = vmatprep.subr.mxu0 0.0
  %482 = vmatpush1.msra.mxu0 %v408
  %483 = vmatprep.subr.mxu0 0.0
  %484 = vmatpush1.msra.mxu0 %v407
  %485 = vmatprep.subr.mxu0 0.0
  %486 = vmatpush1.msra.mxu0 %v406
  %487 = vmatprep.subr.mxu0 0.0
  %488 = vmatpush1.msra.mxu0 %v405
  %489 = vmatprep.subr.mxu0 0.0
  %490 = vmatpush2.msra.mxu0 %v436
  %491 = vmatprep.subr.mxu0 0.0
  %492 = vmatpush2.msra.mxu0 %v435
  %493 = vmatprep.subr.mxu0 0.0
  %494 = vmatpush2.msra.mxu0 %v434
  %495 = vmatprep.subr.mxu0 0.0
  %496 = vmatpush2.msra.mxu0 %v433
  %497 = vmatprep.subr.mxu0 0.0
  %498 = vmatpush2.msra.mxu0 %v432
  %499 = vmatprep.subr.mxu0 0.0
  %500 = vmatpush2.msra.mxu0 %v431
  %501 = vmatprep.subr.mxu0 0.0
  %502 = vmatpush2.msra.mxu0 %v430
  %503 = vmatprep.subr.mxu0 0.0
  %504 = vmatpush2.msra.mxu0 %v429
  %505 = vmatprep.subr.mxu0 0.0
  %506 = vmatpush2.msra.mxu0 %v428
  %507 = vmatprep.subr.mxu0 0.0
  %508 = vmatpush2.msra.mxu0 %v427
  %509 = vmatprep.subr.mxu0 0.0
  %510 = vmatpush2.msra.mxu0 %v426
  %511 = vmatprep.subr.mxu0 0.0
  %512 = vmatpush2.msra.mxu0 %v425
  %513 = vmatprep.subr.mxu0 0.0
  %514 = vmatpush2.msra.mxu0 %v424
  %515 = vmatprep.subr.mxu0 0.0
  %516 = vmatpush2.msra.mxu0 %v423
  %517 = vmatprep.subr.mxu0 0.0
  %518 = vmatpush2.msra.mxu0 %v422
  %519 = vmatprep.subr.mxu0 0.0
  %520 = vmatpush2.msra.mxu0 %v421
  %521 = vmatprep.mubr.f32.mxu0 %v402
  %522 = vmatmul.mubr.f32.gmra.mxu0 %v401
  %v523 = vpop.f32.mrf.mxu0
  %v524 = vadd.f32 0.0, %v523
  %v525 = vpop.f32.mrf.mxu0
  %526 = vdwg.mxu0
  %527 = vmatprep.subr.mxu0 0.0
  %528 = vmatpush1.msra.mxu0 %v452
  %529 = vmatprep.subr.mxu0 0.0
  %530 = vmatpush1.msra.mxu0 %v451
  %531 = vmatprep.subr.mxu0 0.0
  %532 = vmatpush1.msra.mxu0 %v450
  %533 = vmatprep.subr.mxu0 0.0
  %534 = vmatpush1.msra.mxu0 %v449
  %535 = vmatprep.subr.mxu0 0.0
  %536 = vmatpush1.msra.mxu0 %v448
  %537 = vmatprep.subr.mxu0 0.0
  %538 = vmatpush1.msra.mxu0 %v447
  %539 = vmatprep.subr.mxu0 0.0
  %540 = vmatpush1.msra.mxu0 %v446
  %541 = vmatprep.subr.mxu0 0.0
  %542 = vmatpush1.msra.mxu0 %v445
  %543 = vmatprep.subr.mxu0 0.0
  %544 = vmatpush1.msra.mxu0 %v444
  %545 = vmatprep.subr.mxu0 0.0
  %546 = vmatpush1.msra.mxu0 %v443
  %547 = vmatprep.subr.mxu0 0.0
  %548 = vmatpush1.msra.mxu0 %v442
  %549 = vmatprep.subr.mxu0 0.0
  %550 = vmatpush1.msra.mxu0 %v441
  %551 = vmatprep.subr.mxu0 0.0
  %552 = vmatpush1.msra.mxu0 %v440
  %553 = vmatprep.subr.mxu0 0.0
  %554 = vmatpush1.msra.mxu0 %v439
  %555 = vmatprep.subr.mxu0 0.0
  %556 = vmatpush1.msra.mxu0 %v438
  %557 = vmatprep.subr.mxu0 0.0
  %558 = vmatpush1.msra.mxu0 %v437
  %559 = vmatprep.subr.mxu0 0.0
  %560 = vmatpush2.msra.mxu0 0.0
  %561 = vmatprep.subr.mxu0 0.0
  %562 = vmatpush2.msra.mxu0 0.0
  %563 = vmatprep.subr.mxu0 0.0
  %564 = vmatpush2.msra.mxu0 0.0
  %565 = vmatprep.subr.mxu0 0.0
  %566 = vmatpush2.msra.mxu0 0.0
  %567 = vmatprep.subr.mxu0 0.0
  %568 = vmatpush2.msra.mxu0 0.0
  %569 = vmatprep.subr.mxu0 0.0
  %570 = vmatpush2.msra.mxu0 0.0
  %571 = vmatprep.subr.mxu0 0.0
  %572 = vmatpush2.msra.mxu0 0.0
  %573 = vmatprep.subr.mxu0 0.0
  %574 = vmatpush2.msra.mxu0 0.0
  %575 = vmatprep.subr.mxu0 0.0
  %576 = vmatpush2.msra.mxu0 0.0
  %577 = vmatprep.subr.mxu0 0.0
  %578 = vmatpush2.msra.mxu0 0.0
  %579 = vmatprep.subr.mxu0 0.0
  %580 = vmatpush2.msra.mxu0 0.0
  %581 = vmatprep.subr.mxu0 0.0
  %582 = vmatpush2.msra.mxu0 0.0
  %583 = vmatprep.subr.mxu0 0.0
  %584 = vmatpush2.msra.mxu0 0.0
  %585 = vmatprep.subr.mxu0 0.0
  %586 = vmatpush2.msra.mxu0 0.0
  %587 = vmatprep.subr.mxu0 0.0
  %588 = vmatpush2.msra.mxu0 0.0
  %589 = vmatprep.subr.mxu0 0.0
  %590 = vmatpush2.msra.mxu0 %v453
  %591 = vmatprep.mubr.f32.mxu0 %v455
  %592 = vmatmul.mubr.f32.gmra.mxu0 %v403
  %v593 = vpop.f32.mrf.mxu0
  %v594 = vadd.f32 %v524, %v593
  %v595 = vpop.f32.mrf.mxu0
  %596 = vdwg.mxu0
  %v597 = vmax.f32 %v594, -0.1
  %v598 = vmin.f32 %v597, 0.05
  %v599 = vld [vmem:[%s6] sm:$0xff]
  %v600 = vld [vmem:[%s6 + $0x8] sm:$0xff]
  %v601 = vld [vmem:[%s6 + $0x10] sm:$0xff]
  %v602 = vld [vmem:[%s6 + $0x18] sm:$0xff]
  %v603 = vld [vmem:[%s6 + $0x20] sm:$0xff]
  %v604 = vld [vmem:[%s6 + $0x28] sm:$0xff]
  %v605 = vld [vmem:[%s6 + $0x30] sm:$0xff]
  %v606 = vld [vmem:[%s6 + $0x38] sm:$0xff]
  %v607 = vld [vmem:[%s6 + $0x40] sm:$0xff]
  %vm608 = vcmask 588800
  %v610 = vsel %vm608, %v598, 0
  %612 = vmatprep.subr.mxu0 0.0
  %613 = vmatpush1.msra.mxu0 0.0
  %614 = vmatprep.subr.mxu0 0.0
  %615 = vmatpush1.msra.mxu0 0.0
  %616 = vmatprep.subr.mxu0 0.0
  %617 = vmatpush1.msra.mxu0 0.0
  %618 = vmatprep.subr.mxu0 0.0
  %619 = vmatpush1.msra.mxu0 0.0
  %620 = vmatprep.subr.mxu0 0.0
  %621 = vmatpush1.msra.mxu0 0.0
  %622 = vmatprep.subr.mxu0 0.0
  %623 = vmatpush1.msra.mxu0 0.0
  %624 = vmatprep.subr.mxu0 0.0
  %625 = vmatpush1.msra.mxu0 0.0
  %626 = vmatprep.subr.mxu0 0.0
  %627 = vmatpush1.msra.mxu0 %v607
  %628 = vmatprep.subr.mxu0 0.0
  %629 = vmatpush1.msra.mxu0 %v606
  %630 = vmatprep.subr.mxu0 0.0
  %631 = vmatpush1.msra.mxu0 %v605
  %632 = vmatprep.subr.mxu0 0.0
  %633 = vmatpush1.msra.mxu0 %v604
  %634 = vmatprep.subr.mxu0 0.0
  %635 = vmatpush1.msra.mxu0 %v603
  %636 = vmatprep.subr.mxu0 0.0
  %637 = vmatpush1.msra.mxu0 %v602
  %638 = vmatprep.subr.mxu0 0.0
  %639 = vmatpush1.msra.mxu0 %v601
  %640 = vmatprep.subr.mxu0 0.0
  %641 = vmatpush1.msra.mxu0 %v600
  %642 = vmatprep.subr.mxu0 0.0
  %643 = vmatpush1.msra.mxu0 %v599
  %644 = vmatprep.subr.mxu0 0.0
  %645 = vmatpush2.msra.mxu0 0.0
  %646 = vmatprep.subr.mxu0 0.0
  %647 = vmatpush2.msra.mxu0 0.0
  %648 = vmatprep.subr.mxu0 0.0
  %649 = vmatpush2.msra.mxu0 0.0
  %650 = vmatprep.subr.mxu0 0.0
  %651 = vmatpush2.msra.mxu0 0.0
  %652 = vmatprep.subr.mxu0 0.0
  %653 = vmatpush2.msra.mxu0 0.0
  %654 = vmatprep.subr.mxu0 0.0
  %655 = vmatpush2.msra.mxu0 0.0
  %656 = vmatprep.subr.mxu0 0.0
  %657 = vmatpush2.msra.mxu0 0.0
  %658 = vmatprep.subr.mxu0 0.0
  %659 = vmatpush2.msra.mxu0 0.0
  %660 = vmatprep.subr.mxu0 0.0
  %661 = vmatpush2.msra.mxu0 0.0
  %662 = vmatprep.subr.mxu0 0.0
  %663 = vmatpush2.msra.mxu0 0.0
  %664 = vmatprep.subr.mxu0 0.0
  %665 = vmatpush2.msra.mxu0 0.0
  %666 = vmatprep.subr.mxu0 0.0
  %667 = vmatpush2.msra.mxu0 0.0
  %668 = vmatprep.subr.mxu0 0.0
  %669 = vmatpush2.msra.mxu0 0.0
  %670 = vmatprep.subr.mxu0 0.0
  %671 = vmatpush2.msra.mxu0 0.0
  %672 = vmatprep.subr.mxu0 0.0
  %673 = vmatpush2.msra.mxu0 0.0
  %674 = vmatprep.subr.mxu0 0.0
  %675 = vmatpush2.msra.mxu0 0.0
  %676 = vmatprep.mubr.f32.mxu0 0.0
  %677 = vmatmul.mubr.f32.gmra.mxu0 %v610
  %v678 = vpop.f32.mrf.mxu0
  %v679 = vadd.f32 0.0, %v678
  %v680 = vpop.f32.mrf.mxu0
  %681 = vdwg.mxu0
  %s682 = scalar_lea.vmem %s6, 72
  %v683 = vld [vmem:[%s682] sm:$0xff]
  %v684 = vld [vmem:[%s682 + $0x8] sm:$0xff]
  %v685 = vld [vmem:[%s682 + $0x10] sm:$0xff]
  %v686 = vld [vmem:[%s682 + $0x18] sm:$0xff]
  %v687 = vld [vmem:[%s682 + $0x20] sm:$0xff]
  %v688 = vld [vmem:[%s682 + $0x28] sm:$0xff]
  %v689 = vld [vmem:[%s682 + $0x30] sm:$0xff]
  %v690 = vld [vmem:[%s682 + $0x38] sm:$0xff]
  %v691 = vld [vmem:[%s682 + $0x40] sm:$0xff]
  %692 = vmatprep.subr.mxu0 0.0
  %693 = vmatpush1.msra.mxu0 0.0
  %694 = vmatprep.subr.mxu0 0.0
  %695 = vmatpush1.msra.mxu0 0.0
  %696 = vmatprep.subr.mxu0 0.0
  %697 = vmatpush1.msra.mxu0 0.0
  %698 = vmatprep.subr.mxu0 0.0
  %699 = vmatpush1.msra.mxu0 0.0
  %700 = vmatprep.subr.mxu0 0.0
  %701 = vmatpush1.msra.mxu0 0.0
  %702 = vmatprep.subr.mxu0 0.0
  %703 = vmatpush1.msra.mxu0 0.0
  %704 = vmatprep.subr.mxu0 0.0
  %705 = vmatpush1.msra.mxu0 0.0
  %706 = vmatprep.subr.mxu0 0.0
  %707 = vmatpush1.msra.mxu0 %v691
  %708 = vmatprep.subr.mxu0 0.0
  %709 = vmatpush1.msra.mxu0 %v690
  %710 = vmatprep.subr.mxu0 0.0
  %711 = vmatpush1.msra.mxu0 %v689
  %712 = vmatprep.subr.mxu0 0.0
  %713 = vmatpush1.msra.mxu0 %v688
  %714 = vmatprep.subr.mxu0 0.0
  %715 = vmatpush1.msra.mxu0 %v687
  %716 = vmatprep.subr.mxu0 0.0
  %717 = vmatpush1.msra.mxu0 %v686
  %718 = vmatprep.subr.mxu0 0.0
  %719 = vmatpush1.msra.mxu0 %v685
  %720 = vmatprep.subr.mxu0 0.0
  %721 = vmatpush1.msra.mxu0 %v684
  %722 = vmatprep.subr.mxu0 0.0
  %723 = vmatpush1.msra.mxu0 %v683
  %724 = vmatprep.subr.mxu0 0.0
  %725 = vmatpush2.msra.mxu0 0.0
  %726 = vmatprep.subr.mxu0 0.0
  %727 = vmatpush2.msra.mxu0 0.0
  %728 = vmatprep.subr.mxu0 0.0
  %729 = vmatpush2.msra.mxu0 0.0
  %730 = vmatprep.subr.mxu0 0.0
  %731 = vmatpush2.msra.mxu0 0.0
  %732 = vmatprep.subr.mxu0 0.0
  %733 = vmatpush2.msra.mxu0 0.0
  %734 = vmatprep.subr.mxu0 0.0
  %735 = vmatpush2.msra.mxu0 0.0
  %736 = vmatprep.subr.mxu0 0.0
  %737 = vmatpush2.msra.mxu0 0.0
  %738 = vmatprep.subr.mxu0 0.0
  %739 = vmatpush2.msra.mxu0 0.0
  %740 = vmatprep.subr.mxu0 0.0
  %741 = vmatpush2.msra.mxu0 0.0
  %742 = vmatprep.subr.mxu0 0.0
  %743 = vmatpush2.msra.mxu0 0.0
  %744 = vmatprep.subr.mxu0 0.0
  %745 = vmatpush2.msra.mxu0 0.0
  %746 = vmatprep.subr.mxu0 0.0
  %747 = vmatpush2.msra.mxu0 0.0
  %748 = vmatprep.subr.mxu0 0.0
  %749 = vmatpush2.msra.mxu0 0.0
  %750 = vmatprep.subr.mxu0 0.0
  %751 = vmatpush2.msra.mxu0 0.0
  %752 = vmatprep.subr.mxu0 0.0
  %753 = vmatpush2.msra.mxu0 0.0
  %754 = vmatprep.subr.mxu0 0.0
  %755 = vmatpush2.msra.mxu0 0.0
  %756 = vmatprep.mubr.f32.mxu0 0.0
  %757 = vmatmul.mubr.f32.gmra.mxu0 %v610
  %v758 = vpop.f32.mrf.mxu0
  %v759 = vadd.f32 0.0, %v758
  %v760 = vpop.f32.mrf.mxu0
  %761 = vdwg.mxu0
  %v762 = vmax.f32 %v679, %v759
  %s763 = scalar_lea.vmem %s6, 144
  %v764 = vld [vmem:[%s763] sm:$0xff]
  %v765 = vld [vmem:[%s763 + $0x8] sm:$0xff]
  %v766 = vld [vmem:[%s763 + $0x10] sm:$0xff]
  %v767 = vld [vmem:[%s763 + $0x18] sm:$0xff]
  %v768 = vld [vmem:[%s763 + $0x20] sm:$0xff]
  %v769 = vld [vmem:[%s763 + $0x28] sm:$0xff]
  %v770 = vld [vmem:[%s763 + $0x30] sm:$0xff]
  %v771 = vld [vmem:[%s763 + $0x38] sm:$0xff]
  %v772 = vld [vmem:[%s763 + $0x40] sm:$0xff]
  %773 = vmatprep.subr.mxu0 0.0
  %774 = vmatpush1.msra.mxu0 0.0
  %775 = vmatprep.subr.mxu0 0.0
  %776 = vmatpush1.msra.mxu0 0.0
  %777 = vmatprep.subr.mxu0 0.0
  %778 = vmatpush1.msra.mxu0 0.0
  %779 = vmatprep.subr.mxu0 0.0
  %780 = vmatpush1.msra.mxu0 0.0
  %781 = vmatprep.subr.mxu0 0.0
  %782 = vmatpush1.msra.mxu0 0.0
  %783 = vmatprep.subr.mxu0 0.0
  %784 = vmatpush1.msra.mxu0 0.0
  %785 = vmatprep.subr.mxu0 0.0
  %786 = vmatpush1.msra.mxu0 0.0
  %787 = vmatprep.subr.mxu0 0.0
  %788 = vmatpush1.msra.mxu0 %v772
  %789 = vmatprep.subr.mxu0 0.0
  %790 = vmatpush1.msra.mxu0 %v771
  %791 = vmatprep.subr.mxu0 0.0
  %792 = vmatpush1.msra.mxu0 %v770
  %793 = vmatprep.subr.mxu0 0.0
  %794 = vmatpush1.msra.mxu0 %v769
  %795 = vmatprep.subr.mxu0 0.0
  %796 = vmatpush1.msra.mxu0 %v768
  %797 = vmatprep.subr.mxu0 0.0
  %798 = vmatpush1.msra.mxu0 %v767
  %799 = vmatprep.subr.mxu0 0.0
  %800 = vmatpush1.msra.mxu0 %v766
  %801 = vmatprep.subr.mxu0 0.0
  %802 = vmatpush1.msra.mxu0 %v765
  %803 = vmatprep.subr.mxu0 0.0
  %804 = vmatpush1.msra.mxu0 %v764
  %805 = vmatprep.subr.mxu0 0.0
  %806 = vmatpush2.msra.mxu0 0.0
  %807 = vmatprep.subr.mxu0 0.0
  %808 = vmatpush2.msra.mxu0 0.0
  %809 = vmatprep.subr.mxu0 0.0
  %810 = vmatpush2.msra.mxu0 0.0
  %811 = vmatprep.subr.mxu0 0.0
  %812 = vmatpush2.msra.mxu0 0.0
  %813 = vmatprep.subr.mxu0 0.0
  %814 = vmatpush2.msra.mxu0 0.0
  %815 = vmatprep.subr.mxu0 0.0
  %816 = vmatpush2.msra.mxu0 0.0
  %817 = vmatprep.subr.mxu0 0.0
  %818 = vmatpush2.msra.mxu0 0.0
  %819 = vmatprep.subr.mxu0 0.0
  %820 = vmatpush2.msra.mxu0 0.0
  %821 = vmatprep.subr.mxu0 0.0
  %822 = vmatpush2.msra.mxu0 0.0
  %823 = vmatprep.subr.mxu0 0.0
  %824 = vmatpush2.msra.mxu0 0.0
  %825 = vmatprep.subr.mxu0 0.0
  %826 = vmatpush2.msra.mxu0 0.0
  %827 = vmatprep.subr.mxu0 0.0
  %828 = vmatpush2.msra.mxu0 0.0
  %829 = vmatprep.subr.mxu0 0.0
  %830 = vmatpush2.msra.mxu0 0.0
  %831 = vmatprep.subr.mxu0 0.0
  %832 = vmatpush2.msra.mxu0 0.0
  %833 = vmatprep.subr.mxu0 0.0
  %834 = vmatpush2.msra.mxu0 0.0
  %835 = vmatprep.subr.mxu0 0.0
  %836 = vmatpush2.msra.mxu0 0.0
  %837 = vmatprep.mubr.f32.mxu0 0.0
  %838 = vmatmul.mubr.f32.gmra.mxu0 %v610
  %v839 = vpop.f32.mrf.mxu0
  %v840 = vadd.f32 0.0, %v839
  %v841 = vpop.f32.mrf.mxu0
  %842 = vdwg.mxu0
  %v843 = vmax.f32 %v762, %v840
  %s844 = scalar_lea.vmem %s6, 216
  %v845 = vld [vmem:[%s844] sm:$0xff]
  %v846 = vld [vmem:[%s844 + $0x8] sm:$0xff]
  %v847 = vld [vmem:[%s844 + $0x10] sm:$0xff]
  %v848 = vld [vmem:[%s844 + $0x18] sm:$0xff]
  %v849 = vld [vmem:[%s844 + $0x20] sm:$0xff]
  %v850 = vld [vmem:[%s844 + $0x28] sm:$0xff]
  %v851 = vld [vmem:[%s844 + $0x30] sm:$0xff]
  %v852 = vld [vmem:[%s844 + $0x38] sm:$0xff]
  %v853 = vld [vmem:[%s844 + $0x40] sm:$0xff]
  %854 = vmatprep.subr.mxu0 0.0
  %855 = vmatpush1.msra.mxu0 0.0
  %856 = vmatprep.subr.mxu0 0.0
  %857 = vmatpush1.msra.mxu0 0.0
  %858 = vmatprep.subr.mxu0 0.0
  %859 = vmatpush1.msra.mxu0 0.0
  %860 = vmatprep.subr.mxu0 0.0
  %861 = vmatpush1.msra.mxu0 0.0
  %862 = vmatprep.subr.mxu0 0.0
  %863 = vmatpush1.msra.mxu0 0.0
  %864 = vmatprep.subr.mxu0 0.0
  %865 = vmatpush1.msra.mxu0 0.0
  %866 = vmatprep.subr.mxu0 0.0
  %867 = vmatpush1.msra.mxu0 0.0
  %868 = vmatprep.subr.mxu0 0.0
  %869 = vmatpush1.msra.mxu0 %v853
  %870 = vmatprep.subr.mxu0 0.0
  %871 = vmatpush1.msra.mxu0 %v852
  %872 = vmatprep.subr.mxu0 0.0
  %873 = vmatpush1.msra.mxu0 %v851
  %874 = vmatprep.subr.mxu0 0.0
  %875 = vmatpush1.msra.mxu0 %v850
  %876 = vmatprep.subr.mxu0 0.0
  %877 = vmatpush1.msra.mxu0 %v849
  %878 = vmatprep.subr.mxu0 0.0
  %879 = vmatpush1.msra.mxu0 %v848
  %880 = vmatprep.subr.mxu0 0.0
  %881 = vmatpush1.msra.mxu0 %v847
  %882 = vmatprep.subr.mxu0 0.0
  %883 = vmatpush1.msra.mxu0 %v846
  %884 = vmatprep.subr.mxu0 0.0
  %885 = vmatpush1.msra.mxu0 %v845
  %886 = vmatprep.subr.mxu0 0.0
  %887 = vmatpush2.msra.mxu0 0.0
  %888 = vmatprep.subr.mxu0 0.0
  %889 = vmatpush2.msra.mxu0 0.0
  %890 = vmatprep.subr.mxu0 0.0
  %891 = vmatpush2.msra.mxu0 0.0
  %892 = vmatprep.subr.mxu0 0.0
  %893 = vmatpush2.msra.mxu0 0.0
  %894 = vmatprep.subr.mxu0 0.0
  %895 = vmatpush2.msra.mxu0 0.0
  %896 = vmatprep.subr.mxu0 0.0
  %897 = vmatpush2.msra.mxu0 0.0
  %898 = vmatprep.subr.mxu0 0.0
  %899 = vmatpush2.msra.mxu0 0.0
  %900 = vmatprep.subr.mxu0 0.0
  %901 = vmatpush2.msra.mxu0 0.0
  %902 = vmatprep.subr.mxu0 0.0
  %903 = vmatpush2.msra.mxu0 0.0
  %904 = vmatprep.subr.mxu0 0.0
  %905 = vmatpush2.msra.mxu0 0.0
  %906 = vmatprep.subr.mxu0 0.0
  %907 = vmatpush2.msra.mxu0 0.0
  %908 = vmatprep.subr.mxu0 0.0
  %909 = vmatpush2.msra.mxu0 0.0
  %910 = vmatprep.subr.mxu0 0.0
  %911 = vmatpush2.msra.mxu0 0.0
  %912 = vmatprep.subr.mxu0 0.0
  %913 = vmatpush2.msra.mxu0 0.0
  %914 = vmatprep.subr.mxu0 0.0
  %915 = vmatpush2.msra.mxu0 0.0
  %916 = vmatprep.subr.mxu0 0.0
  %917 = vmatpush2.msra.mxu0 0.0
  %918 = vmatprep.mubr.f32.mxu0 0.0
  %919 = vmatmul.mubr.f32.gmra.mxu0 %v610
  %v920 = vpop.f32.mrf.mxu0
  %v921 = vadd.f32 0.0, %v920
  %v922 = vpop.f32.mrf.mxu0
  %923 = vdwg.mxu0
  %v924 = vmax.f32 %v843, %v921
  %v925 = vmax.f32 %v924, 0.05
  %v926 = vmin.f32 %v925, -0.1
  %vm927 = vcmask 244736
  %928 = vst.msk [vmem:[%s7] sm:$0xff] %vm927, %v926
  // Predicated region
  $region30: #{model_forward.1} parent=0 // pred_check
    _
  $region31: #{model_forward.1} parent=0 // pred_check_branch
    %930 = sbr.rel (0) target = $region33
  $region32: #{model_forward.1} parent=0 // pred_region
    _
  $region33: #{model_forward.1} parent=0 // pred_fallthru
    _
  // Predicated region
  $region34: #{model_forward.1} parent=0 // pred_check
    _
  $region35: #{model_forward.1} parent=0 // pred_check_branch
    %932 = sbr.rel (0) target = $region37
  $region36: #{model_forward.1} parent=0 // pred_region
    _
  $region37: #{model_forward.1} parent=0 // pred_fallthru
    _

</llo_original>
